<compile_context>
chip_gen: v6e
topology: v6e:2x2x1
jax: 0.10.0
libtpu: 0.0.40
codegen_flags: <defaults>
</compile_context>

<pallas_src>
import jax
import jax.numpy as jnp
from jax.experimental import pallas as pl
from jax.experimental.pallas import tpu as pltpu


def _attention_kernel(x_ref, w_ref, b_ref, ctx_ref, attn_ref):
    # x_ref:    (TB, S, D)  lstm_output tile, native dtype (NOT up-cast)
    # w_ref:    (1, D)      nn.Linear weight (out=1, in=D)
    # b_ref:    (1,)        nn.Linear bias, f32 scalar in SMEM
    # ctx_ref:  (TB, D)     context output tile       (lane-dense, last dim = D)
    # attn_ref: (TB, S)     attention weights tile    (reshaped to (B,S,1) outside)
    x = x_ref[...]                                       # (TB, S, D) native dtype
    w = w_ref[...].astype(x.dtype)                       # (1, D)
    b = b_ref[0]                                         # f32 scalar from SMEM

    tb, _, d = x.shape

    # Linear(D -> 1): scores[b, s] = <x[b, s, :], w> + bias.
    # Batched (1, D) x (S, D)^T contraction on the MXU (same structure as the
    # flash-attention 'bqd,bkd->bqk' einsum) -> no (TB,S,D) elementwise temp.
    w_b = jnp.broadcast_to(w[None], (tb, 1, d))          # tiny (TB,1,D) broadcast
    scores = jnp.einsum("bkd,bsd->bks", w_b, x,
                        preferred_element_type=jnp.float32)[:, 0, :] + b  # (TB,S) f32

    # softmax over the sequence axis (dim=1 in PyTorch), statistics in f32
    m = jnp.max(scores, axis=1, keepdims=True)           # (TB, 1)
    e = jnp.exp(scores - m)                              # (TB, S)   EUP
    denom = jnp.sum(e, axis=1, keepdims=True)            # (TB, 1)
    inv = 1.0 / denom                                    # exact: rows sum to 1
    attn = e * inv                                       # (TB, S) f32

    # context[b, :] = sum_s attn[b, s] * x[b, s, :]
    # Batched (1, S) @ (S, D) matmul on the MXU in x's native dtype.
    ctx = jnp.einsum("bqs,bsd->bqd", attn[:, None, :].astype(x.dtype), x,
                     preferred_element_type=jnp.float32)[:, 0, :]   # (TB, D) f32

    ctx_ref[...] = ctx.astype(ctx_ref.dtype)
    attn_ref[...] = attn.astype(attn_ref.dtype)


def _vmem_capacity_bytes():
    """Physical VMEM per TensorCore (v5e/v6e: 128 MiB, v7x: 64 MiB)."""
    try:
        cap = int(pltpu.get_tpu_info().vmem_capacity_bytes)
        if cap > 0:
            return cap
    except Exception:
        pass
    return 64 * 1024 * 1024     # conservative fallback = v7x per-TC VMEM


def _per_row_bytes(S, D, in_itemsize, out_itemsize):
    """Pipelined + in-kernel working-set bytes per batch row."""
    per_row = 2 * S * D * in_itemsize          # double-buffered x block
    per_row += 2 * (D + S) * out_itemsize      # double-buffered output blocks
    per_row += 6 * S * 4                       # f32 scores / exp / attn rows
    per_row += D * 4                           # f32 ctx row
    return per_row


def _pick_batch_tile(B, S, D, in_itemsize, out_itemsize, budget_bytes):
    """Largest sublane-aligned batch tile whose footprint fits the budget.
    Rounds DOWN (never inflates past the budget, unlike the old max(8, ...))."""
    per_row = _per_row_bytes(S, D, in_itemsize, out_itemsize)
    tb = int(budget_bytes // per_row)
    if tb >= B:
        return B                               # whole batch in one block
    if tb >= 8:
        return (tb // 8) * 8                   # round DOWN to a sublane multiple
    # Block shapes need tb % 8 == 0 (or tb == B); accept exceeding the soft
    # budget here and cover it with an explicit vmem_limit_bytes below.
    return max(1, min(8, B))


def attention_forward(lstm_output, weight, bias):
    """lstm_output: (B, S, D); weight: (1, D); bias: (1,).

    Returns (context (B, D), attention_weights (B, S, 1)) — matches the PyTorch
    module's forward outputs (output dtype == input dtype, as in PyTorch).
    """
    B, S, D = lstm_output.shape
    out_dtype = lstm_output.dtype
    in_itemsize = lstm_output.dtype.itemsize
    out_itemsize = jnp.dtype(out_dtype).itemsize

    capacity = _vmem_capacity_bytes()
    budget = (capacity * 5) // 8               # ~80 MiB on v5e/v6e, ~40 MiB on v7x
    tb = _pick_batch_tile(B, S, D, in_itemsize, out_itemsize, budget)

    # v7x has 2 TensorCores per chip: keep >= 2 (parallel) grid steps so both
    # get work when the batch is big enough (harmless extra step on v5e/v6e).
    if B >= 16 and tb >= B:
        tb = min(B, ((pl.cdiv(B, 2) + 7) // 8) * 8)

    grid = (pl.cdiv(B, tb),)

    # Explicit VMEM limit sized to the chosen tile (scoped default is only
    # 16/32 MiB); always leave headroom below the physical capacity.
    footprint = tb * _per_row_bytes(S, D, in_itemsize, out_itemsize) + 4 * D * 4
    vmem_limit = int(min(capacity - (4 << 20),
                         max(budget, footprint + (2 << 20))))

    w2d = weight.reshape(1, D)                       # native dtype, cast in-kernel
    b1d = bias.reshape(1).astype(jnp.float32)        # scalar -> f32 SMEM

    ctx, attn = pl.pallas_call(
        _attention_kernel,
        out_shape=(
            jax.ShapeDtypeStruct((B, D), out_dtype),
            jax.ShapeDtypeStruct((B, S), out_dtype),
        ),
        grid=grid,
        in_specs=[
            pl.BlockSpec((tb, S, D), lambda i: (i, 0, 0)),   # pipelined batch tiles
            pl.BlockSpec((1, D), lambda i: (0, 0)),          # weight, reused each step
            pl.BlockSpec(memory_space=pltpu.SMEM),           # bias scalar
        ],
        out_specs=(
            pl.BlockSpec((tb, D), lambda i: (i, 0)),
            pl.BlockSpec((tb, S), lambda i: (i, 0)),
        ),
        compiler_params=pltpu.CompilerParams(
            dimension_semantics=("parallel",),               # dual-TC on v7x
            vmem_limit_bytes=vmem_limit),
    )(lstm_output, w2d, b1d)

    # glue: present attention weights as (B, S, 1) like the PyTorch module
    return ctx, attn.reshape(B, S, 1)


def _reference(lstm_output, weight, bias):
    # pure-JAX reference mirroring the PyTorch forward
    scores = jnp.einsum("bsd,od->bso", lstm_output, weight) + bias  # (B, S, 1)
    attn = jax.nn.softmax(scores, axis=1)
    ctx = jnp.sum(lstm_output * attn, axis=1)
    return ctx, attn


if __name__ == "__main__":
    key = jax.random.PRNGKey(0)
    hidden_size = 16
    B, S, D = 2, 8, hidden_size * 2

    k_x, k_w, k_b = jax.random.split(key, 3)
    lstm_output = jax.random.normal(k_x, (B, S, D), dtype=jnp.float32)
    # deterministic nn.Linear-style init: U(-1/sqrt(D), 1/sqrt(D))
    bound = 1.0 / (D ** 0.5)
    weight = jax.random.uniform(k_w, (1, D), minval=-bound, maxval=bound,
                                dtype=jnp.float32)
    bias = jax.random.uniform(k_b, (1,), minval=-bound, maxval=bound,
                              dtype=jnp.float32)

    ctx, attn = attention_forward(lstm_output, weight, bias)
    jax.block_until_ready((ctx, attn))

    ref_ctx, ref_attn = _reference(lstm_output, weight, bias)
    assert ctx.shape == (B, D) and attn.shape == (B, S, 1)
    # exact normalization -> attention weights sum to 1 along the seq axis
    assert jnp.allclose(jnp.sum(attn[:, :, 0], axis=1), 1.0, atol=1e-5)
    assert jnp.allclose(ctx, ref_ctx, atol=2e-3, rtol=2e-3)
    assert jnp.allclose(attn, ref_attn, atol=2e-3, rtol=2e-3)

    print("KERNEL_OK")
</pallas_src>

<mosaic_0001>
module attributes {stable_mosaic.version = 11 : i64} {
  func.func @_attention_kernel(%arg0: i32, %arg1: memref<2x8x32xf32, #tpu.memory_space<vmem>>, %arg2: memref<1x32xf32, #tpu.memory_space<vmem>>, %arg3: memref<1xf32, #tpu.memory_space<smem>>, %arg4: memref<2x32xf32, #tpu.memory_space<vmem>>, %arg5: memref<2x8xf32, #tpu.memory_space<vmem>>) attributes {dimension_semantics = [#tpu.dimension_semantics<parallel>], iteration_bounds = array<i64: 1>, scalar_prefetch = 0 : i64, scratch_operands = 0 : i64, tpu.core_type = #tpu.core_type<tc>, window_params = [{transform_indices = @transform_0, window_bounds = array<i64: 2, 8, 32>}, {pipeline_mode = #tpu.pipeline_mode<synchronous>, transform_indices = @transform_1, window_bounds = array<i64: 1, 32>}, {transform_indices = @transform_2, window_bounds = array<i64: 1>}, {transform_indices = @transform_3, window_bounds = array<i64: 2, 32>}, {transform_indices = @transform_4, window_bounds = array<i64: 2, 8>}]} {
    %c0 = arith.constant 0 : index
    %c0_0 = arith.constant 0 : index
    %c0_1 = arith.constant 0 : index
    %0 = vector.load %arg1[%c0, %c0_0, %c0_1] : memref<2x8x32xf32, #tpu.memory_space<vmem>>, vector<2x8x32xf32>
    %c0_2 = arith.constant 0 : index
    %c0_3 = arith.constant 0 : index
    %1 = vector.load %arg2[%c0_2, %c0_3] : memref<1x32xf32, #tpu.memory_space<vmem>>, vector<1x32xf32>
    %c0_4 = arith.constant 0 : index
    %2 = memref.load %arg3[%c0_4] : memref<1xf32, #tpu.memory_space<smem>>
    %3 = vector.shape_cast %1 : vector<1x32xf32> to vector<1x1x32xf32>
    %4 = vector.shape_cast %3 : vector<1x1x32xf32> to vector<1x1x32xf32>
    %5 = vector.broadcast %4 : vector<1x1x32xf32> to vector<2x1x32xf32>
    "tpu.trace_start"() <{level = 10 : i32, message = "bkd,bsd->bks"}> : () -> ()
    %cst = arith.constant dense<0.000000e+00> : vector<2x1x8xf32>
    %6 = tpu.matmul %5, %0, %cst {dimension_numbers = #tpu.dot_dimension_numbers<[2], [2], [1], [1], [0, 0, 0, 1, 1, 1], [0], [0]>} : vector<2x1x32xf32>, vector<2x8x32xf32>, vector<2x1x8xf32> -> vector<2x1x8xf32>
    "tpu.trace_stop"() : () -> ()
    %7 = vector.shape_cast %6 : vector<2x1x8xf32> to vector<2x8xf32>
    %8 = vector.broadcast %2 : f32 to vector<2x8xf32>
    %9 = arith.addf %7, %8 : vector<2x8xf32>
    %cst_5 = arith.constant dense<0xFF800000> : vector<2xf32>
    %10 = vector.multi_reduction <maximumf>, %9, %cst_5 [1] : vector<2x8xf32> to vector<2xf32>
    %11 = vector.shape_cast %10 : vector<2xf32> to vector<2x1xf32>
    %12 = vector.broadcast %11 : vector<2x1xf32> to vector<2x8xf32>
    %13 = arith.subf %9, %12 : vector<2x8xf32>
    %14 = math.exp %13 : vector<2x8xf32>
    %cst_6 = arith.constant dense<0.000000e+00> : vector<2xf32>
    %15 = vector.multi_reduction <add>, %14, %cst_6 [1] : vector<2x8xf32> to vector<2xf32>
    %16 = vector.shape_cast %15 : vector<2xf32> to vector<2x1xf32>
    %cst_7 = arith.constant 1.000000e+00 : f32
    %17 = vector.broadcast %cst_7 : f32 to vector<2x1xf32>
    %18 = arith.divf %17, %16 : vector<2x1xf32>
    %19 = vector.broadcast %18 : vector<2x1xf32> to vector<2x8xf32>
    %20 = arith.mulf %14, %19 : vector<2x8xf32>
    %21 = vector.shape_cast %20 : vector<2x8xf32> to vector<2x1x8xf32>
    "tpu.trace_start"() <{level = 10 : i32, message = "bqs,bsd->bqd"}> : () -> ()
    %cst_8 = arith.constant dense<0.000000e+00> : vector<2x1x32xf32>
    %22 = tpu.matmul %21, %0, %cst_8 {dimension_numbers = #tpu.dot_dimension_numbers<[2], [1], [1], [2], [0, 0, 0, 1, 1, 2], [0], [0]>} : vector<2x1x8xf32>, vector<2x8x32xf32>, vector<2x1x32xf32> -> vector<2x1x32xf32>
    "tpu.trace_stop"() : () -> ()
    %23 = vector.shape_cast %22 : vector<2x1x32xf32> to vector<2x32xf32>
    %c0_9 = arith.constant 0 : index
    %c0_10 = arith.constant 0 : index
    %24 = vector.load %arg4[%c0_9, %c0_10] : memref<2x32xf32, #tpu.memory_space<vmem>>, vector<2x32xf32>
    tpu.vector_store %arg4[%c0_9, %c0_10], %23 {strides = array<i32>} : memref<2x32xf32, #tpu.memory_space<vmem>>, vector<2x32xf32>,
    %c0_11 = arith.constant 0 : index
    %c0_12 = arith.constant 0 : index
    %25 = vector.load %arg5[%c0_11, %c0_12] : memref<2x8xf32, #tpu.memory_space<vmem>>, vector<2x8xf32>
    tpu.vector_store %arg5[%c0_11, %c0_12], %20 {strides = array<i32>} : memref<2x8xf32, #tpu.memory_space<vmem>>, vector<2x8xf32>,
    return
  }
  func.func @transform_0(%arg0: i32) -> (i32, i32, i32) {
    %c0_i32 = arith.constant 0 : i32
    %c0_i32_0 = arith.constant 0 : i32
    %c0_i32_1 = arith.constant 0 : i32
    return %arg0, %c0_i32, %c0_i32_0 : i32, i32, i32
  }
  func.func @transform_1(%arg0: i32) -> (i32, i32) {
    %c0_i32 = arith.constant 0 : i32
    %c0_i32_0 = arith.constant 0 : i32
    %c0_i32_1 = arith.constant 0 : i32
    return %c0_i32, %c0_i32_0 : i32, i32
  }
  func.func @transform_2(%arg0: i32) -> i32 {
    %c0_i32 = arith.constant 0 : i32
    %c0_i32_0 = arith.constant 0 : i32
    return %c0_i32 : i32
  }
  func.func @transform_3(%arg0: i32) -> (i32, i32) {
    %c0_i32 = arith.constant 0 : i32
    %c0_i32_0 = arith.constant 0 : i32
    return %arg0, %c0_i32 : i32, i32
  }
  func.func @transform_4(%arg0: i32) -> (i32, i32) {
    %c0_i32 = arith.constant 0 : i32
    %c0_i32_0 = arith.constant 0 : i32
    return %arg0, %c0_i32 : i32, i32
  }
}

</mosaic_0001>

<llo_original>
// kernel: tpu_custom_call.1
$region0: #{tpu_custom_call.1}
  #allocation0 [shape = 'u32[]', space=smem, size = 0x4, offset = 0x4, fixed_abs, tag = 'smem constant byte address 0x4 - core index']
  #allocation1 [shape = 'u32[144,128]{1,0:T(1,128)}', space=vmem, size = 0x12000, scoped, tag = 'internal scratch']
  #allocation2 [shape = 'f32[1]{0:T(128)S(6)}', space=smem, size = 0x200, scoped, tag = 'scoped memory for tpu_custom_call.1']
  %s0 = inlined_call_operand.hbm [shape: f32[2,8,32], index: 0, kind: input, shape index: {}]
  %s1 = inlined_call_operand.vmem [shape: f32[1,32], index: 1, kind: input, shape index: {}]
  %s2 = inlined_call_operand.<no memory space> [shape: f32[1], index: 2, kind: input, shape index: {}]
  %s3 = inlined_call_operand.hbm [shape: f32[2,32], index: 3, kind: output, shape index: {0}]
  %s4 = inlined_call_operand.hbm [shape: f32[2,8], index: 4, kind: output, shape index: {1}]
  %5 = xla_tuple %s3, %s4
  %s6 = sld [smem:[#allocation0]]
  $region34: #{tpu_custom_call.1} parent=0
    _
  %s8 = ssub.s32 1, %s6
  %s9 = scalar_select 0, %s8, %s6
  %10 = sst [smem:[#allocation2]] %s2
  $region1: #{tpu_custom_call.1} parent=0
    #allocation3 [shape = 'u8[8192]{0}', space=vmem, size = 0x2000, scoped, tag = 'input window, operand 0, single buffered']
    #allocation4 [shape = 's32[1]{0}', space=sflag, size = 0x4, scoped, tag = 'scoped memory for tpu_custom_call.1']
    #allocation5 [shape = 's32[1]{0}', space=sflag, size = 0x4, scoped, tag = 'scoped memory for tpu_custom_call.1']
    #allocation6 [shape = 'u8[1024]{0}', space=vmem, size = 0x400, scoped, tag = 'output window, operand 0, single buffered']
    #allocation7 [shape = 'u8[1024]{0}', space=vmem, size = 0x400, scoped, tag = 'output window, operand 1, single buffered']
    #allocation8 [shape = 's32[1]{0}', space=sflag, size = 0x4, scoped, tag = 'scoped memory for tpu_custom_call.1']
    %11 = vsyncpa [#allocation4], 0
    %12 = vsyncpa [#allocation5], 0
    %13 = vsyncpa [#allocation8], 0
    // Predicated region
    $region2: #{tpu_custom_call.1} parent=1 // pred_check
      _
    $region3: #{tpu_custom_call.1} parent=1 // pred_check_branch
      %15 = sbr.rel (0) target = $region5
    $region4: #{tpu_custom_call.1} parent=1 // pred_region
      %s17 = ssub.s32 256, 256
      %18 = vsyncadd [#allocation4], %s17
      %s19 = sshll.u32 [#allocation3], 4
      %s20 = int_to_ptr.vmem [resolvable:$true] %s19
      %25 = dma.hbm_to_vmem [thread:$0]  %s0, 256, %s20, [#allocation4], 128, 128, 8
    $region5: #{tpu_custom_call.1} parent=1 // pred_fallthru
      _
    // Predicated region
    $region6: #{tpu_custom_call.1} parent=1 // pred_check
      _
    $region7: #{tpu_custom_call.1} parent=1 // pred_check_branch
      %27 = sbr.rel (0) target = $region9
    $region8: #{tpu_custom_call.1} parent=1 // pred_region
      _
    $region9: #{tpu_custom_call.1} parent=1 // pred_fallthru
      _
    // Predicated region
    $region10: #{tpu_custom_call.1} parent=1 // pred_check
      _
    $region11: #{tpu_custom_call.1} parent=1 // pred_check_branch
      %29 = sbr.rel (0) target = $region13
    $region12: #{tpu_custom_call.1} parent=1 // pred_region
      _
    $region13: #{tpu_custom_call.1} parent=1 // pred_fallthru
      _
    // Predicated region
    $region14: #{tpu_custom_call.1} parent=1 // pred_check
      _
    $region15: #{tpu_custom_call.1} parent=1 // pred_check_branch
      %31 = sbr.rel (0) target = $region17
    $region16: #{tpu_custom_call.1} parent=1 // pred_region
      %32 = dma.done [#allocation4], 256
    $region17: #{tpu_custom_call.1} parent=1 // pred_fallthru
      _
    %v33 = vld [vmem:[#allocation3] sm:$0xff]
    %v34 = vld [vmem:[#allocation3 + $0x8] sm:$0xff]
    %v35 = vld [vmem:[%s1] sm:$0x1]
    %s36 = sld [smem:[#allocation2]]
    %vm37 = vcmask 261120
    %v39 = vsel %vm37, %v35, 0
    %v42 = vsel %vm37, %v33, 0
    %44 = vmatprep.subr.mxu0 0.0
    %45 = vmatpush1.xpose.msra.mxu0 0.0
    %46 = vmatprep.subr.mxu0 0.0
    %47 = vmatpush1.xpose.msra.mxu0 0.0
    %48 = vmatprep.subr.mxu0 0.0
    %49 = vmatpush1.xpose.msra.mxu0 0.0
    %50 = vmatprep.subr.mxu0 0.0
    %51 = vmatpush1.xpose.msra.mxu0 0.0
    %52 = vmatprep.subr.mxu0 0.0
    %53 = vmatpush1.xpose.msra.mxu0 0.0
    %54 = vmatprep.subr.mxu0 0.0
    %55 = vmatpush1.xpose.msra.mxu0 0.0
    %56 = vmatprep.subr.mxu0 0.0
    %57 = vmatpush1.xpose.msra.mxu0 0.0
    %58 = vmatprep.subr.mxu0 0.0
    %59 = vmatpush1.xpose.msra.mxu0 0.0
    %60 = vmatprep.subr.mxu0 0.0
    %61 = vmatpush1.xpose.msra.mxu0 0.0
    %62 = vmatprep.subr.mxu0 0.0
    %63 = vmatpush1.xpose.msra.mxu0 0.0
    %64 = vmatprep.subr.mxu0 0.0
    %65 = vmatpush1.xpose.msra.mxu0 0.0
    %66 = vmatprep.subr.mxu0 0.0
    %67 = vmatpush1.xpose.msra.mxu0 0.0
    %68 = vmatprep.subr.mxu0 0.0
    %69 = vmatpush1.xpose.msra.mxu0 0.0
    %70 = vmatprep.subr.mxu0 0.0
    %71 = vmatpush1.xpose.msra.mxu0 0.0
    %72 = vmatprep.subr.mxu0 0.0
    %73 = vmatpush1.xpose.msra.mxu0 0.0
    %74 = vmatprep.subr.mxu0 0.0
    %75 = vmatpush1.xpose.msra.mxu0 %v42
    %76 = vmatprep.subr.mxu0 0.0
    %77 = vmatpush2.xpose.msra.mxu0 0.0
    %78 = vmatprep.subr.mxu0 0.0
    %79 = vmatpush2.xpose.msra.mxu0 0.0
    %80 = vmatprep.subr.mxu0 0.0
    %81 = vmatpush2.xpose.msra.mxu0 0.0
    %82 = vmatprep.subr.mxu0 0.0
    %83 = vmatpush2.xpose.msra.mxu0 0.0
    %84 = vmatprep.subr.mxu0 0.0
    %85 = vmatpush2.xpose.msra.mxu0 0.0
    %86 = vmatprep.subr.mxu0 0.0
    %87 = vmatpush2.xpose.msra.mxu0 0.0
    %88 = vmatprep.subr.mxu0 0.0
    %89 = vmatpush2.xpose.msra.mxu0 0.0
    %90 = vmatprep.subr.mxu0 0.0
    %91 = vmatpush2.xpose.msra.mxu0 0.0
    %92 = vmatprep.subr.mxu0 0.0
    %93 = vmatpush2.xpose.msra.mxu0 0.0
    %94 = vmatprep.subr.mxu0 0.0
    %95 = vmatpush2.xpose.msra.mxu0 0.0
    %96 = vmatprep.subr.mxu0 0.0
    %97 = vmatpush2.xpose.msra.mxu0 0.0
    %98 = vmatprep.subr.mxu0 0.0
    %99 = vmatpush2.xpose.msra.mxu0 0.0
    %100 = vmatprep.subr.mxu0 0.0
    %101 = vmatpush2.xpose.msra.mxu0 0.0
    %102 = vmatprep.subr.mxu0 0.0
    %103 = vmatpush2.xpose.msra.mxu0 0.0
    %104 = vmatprep.subr.mxu0 0.0
    %105 = vmatpush2.xpose.msra.mxu0 0.0
    %106 = vmatprep.subr.mxu0 0.0
    %107 = vmatpush2.xpose.msra.mxu0 0.0
    %108 = vmatprep.mubr.f32.mxu0 0.0
    %109 = vmatmul.mubr.f32.gmra.mxu0 %v39
    %v110 = vpop.f32.mrf.mxu0
    %v111 = vadd.f32 0.0, %v110
    %v112 = vpop.f32.mrf.mxu0
    %113 = vdwg.mxu0
    %v115 = vsel %vm37, %v34, 0
    %117 = vmatprep.subr.mxu0 0.0
    %118 = vmatpush1.xpose.msra.mxu0 0.0
    %119 = vmatprep.subr.mxu0 0.0
    %120 = vmatpush1.xpose.msra.mxu0 0.0
    %121 = vmatprep.subr.mxu0 0.0
    %122 = vmatpush1.xpose.msra.mxu0 0.0
    %123 = vmatprep.subr.mxu0 0.0
    %124 = vmatpush1.xpose.msra.mxu0 0.0
    %125 = vmatprep.subr.mxu0 0.0
    %126 = vmatpush1.xpose.msra.mxu0 0.0
    %127 = vmatprep.subr.mxu0 0.0
    %128 = vmatpush1.xpose.msra.mxu0 0.0
    %129 = vmatprep.subr.mxu0 0.0
    %130 = vmatpush1.xpose.msra.mxu0 0.0
    %131 = vmatprep.subr.mxu0 0.0
    %132 = vmatpush1.xpose.msra.mxu0 0.0
    %133 = vmatprep.subr.mxu0 0.0
    %134 = vmatpush1.xpose.msra.mxu0 0.0
    %135 = vmatprep.subr.mxu0 0.0
    %136 = vmatpush1.xpose.msra.mxu0 0.0
    %137 = vmatprep.subr.mxu0 0.0
    %138 = vmatpush1.xpose.msra.mxu0 0.0
    %139 = vmatprep.subr.mxu0 0.0
    %140 = vmatpush1.xpose.msra.mxu0 0.0
    %141 = vmatprep.subr.mxu0 0.0
    %142 = vmatpush1.xpose.msra.mxu0 0.0
    %143 = vmatprep.subr.mxu0 0.0
    %144 = vmatpush1.xpose.msra.mxu0 0.0
    %145 = vmatprep.subr.mxu0 0.0
    %146 = vmatpush1.xpose.msra.mxu0 0.0
    %147 = vmatprep.subr.mxu0 0.0
    %148 = vmatpush1.xpose.msra.mxu0 %v115
    %149 = vmatprep.subr.mxu0 0.0
    %150 = vmatpush2.xpose.msra.mxu0 0.0
    %151 = vmatprep.subr.mxu0 0.0
    %152 = vmatpush2.xpose.msra.mxu0 0.0
    %153 = vmatprep.subr.mxu0 0.0
    %154 = vmatpush2.xpose.msra.mxu0 0.0
    %155 = vmatprep.subr.mxu0 0.0
    %156 = vmatpush2.xpose.msra.mxu0 0.0
    %157 = vmatprep.subr.mxu0 0.0
    %158 = vmatpush2.xpose.msra.mxu0 0.0
    %159 = vmatprep.subr.mxu0 0.0
    %160 = vmatpush2.xpose.msra.mxu0 0.0
    %161 = vmatprep.subr.mxu0 0.0
    %162 = vmatpush2.xpose.msra.mxu0 0.0
    %163 = vmatprep.subr.mxu0 0.0
    %164 = vmatpush2.xpose.msra.mxu0 0.0
    %165 = vmatprep.subr.mxu0 0.0
    %166 = vmatpush2.xpose.msra.mxu0 0.0
    %167 = vmatprep.subr.mxu0 0.0
    %168 = vmatpush2.xpose.msra.mxu0 0.0
    %169 = vmatprep.subr.mxu0 0.0
    %170 = vmatpush2.xpose.msra.mxu0 0.0
    %171 = vmatprep.subr.mxu0 0.0
    %172 = vmatpush2.xpose.msra.mxu0 0.0
    %173 = vmatprep.subr.mxu0 0.0
    %174 = vmatpush2.xpose.msra.mxu0 0.0
    %175 = vmatprep.subr.mxu0 0.0
    %176 = vmatpush2.xpose.msra.mxu0 0.0
    %177 = vmatprep.subr.mxu0 0.0
    %178 = vmatpush2.xpose.msra.mxu0 0.0
    %179 = vmatprep.subr.mxu0 0.0
    %180 = vmatpush2.xpose.msra.mxu0 0.0
    %181 = vmatprep.mubr.f32.mxu0 0.0
    %182 = vmatmul.mubr.f32.gmra.mxu0 %v39
    %v183 = vpop.f32.mrf.mxu0
    %v184 = vadd.f32 0.0, %v183
    %v185 = vpop.f32.mrf.mxu0
    %186 = vdwg.mxu0
    %v187 = vstv %s36
    %v188 = vadd.f32 %v111, %v187
    %v189 = vadd.f32 %v184, %v187
    %v192 = vrot.slane %v189, 7
    %vm193 = vcmask 1041409
    %v194 = vsel %vm193, %v192, %v188
    %vm196 = vcmask 58368
    %v197 = vsel %vm196, %v194, -inf
    %198 = vmax.xlane.f32.xlu0 %v197
    %v199 = vpop.xlane.xlu0 %198
    %v201 = vrot.slane %v199, 1
    %v204 = vsub.f32 %v188, %v199
    %v205 = vsub.f32 %v189, %v201
    %v206 = vmul.f32 %v204, 1.442695
    %v207 = vpow.pop %v206
    %v208 = vmul.f32 %v205, 1.442695
    %v209 = vpow.pop %v208
    %v212 = vrot.slane %v209, 7
    %v213 = vsel %vm193, %v212, %v207
    %v215 = vsel %vm196, %v213, 0.0
    %216 = vadd.xlane.f32.xlu0 %v215
    %v217 = vpop.xlane.xlu0 %216
    %v218 = vrcp.pop %v217
    %v219 = vmul.f32 1.0, %v218
    %v221 = vrot.slane %v219, 1
    %v224 = vmul.f32 %v207, %v219
    %v225 = vmul.f32 %v209, %v221
    %vm226 = vcmask 64512
    %v228 = vsel %vm226, %v224, 0
    %230 = vmatprep.subr.mxu0 0.0
    %231 = vmatpush1.msra.mxu0 0.0
    %232 = vmatprep.subr.mxu0 0.0
    %233 = vmatpush1.msra.mxu0 0.0
    %234 = vmatprep.subr.mxu0 0.0
    %235 = vmatpush1.msra.mxu0 0.0
    %236 = vmatprep.subr.mxu0 0.0
    %237 = vmatpush1.msra.mxu0 0.0
    %238 = vmatprep.subr.mxu0 0.0
    %239 = vmatpush1.msra.mxu0 0.0
    %240 = vmatprep.subr.mxu0 0.0
    %241 = vmatpush1.msra.mxu0 0.0
    %242 = vmatprep.subr.mxu0 0.0
    %243 = vmatpush1.msra.mxu0 0.0
    %244 = vmatprep.subr.mxu0 0.0
    %245 = vmatpush1.msra.mxu0 0.0
    %246 = vmatprep.subr.mxu0 0.0
    %247 = vmatpush1.msra.mxu0 0.0
    %248 = vmatprep.subr.mxu0 0.0
    %249 = vmatpush1.msra.mxu0 0.0
    %250 = vmatprep.subr.mxu0 0.0
    %251 = vmatpush1.msra.mxu0 0.0
    %252 = vmatprep.subr.mxu0 0.0
    %253 = vmatpush1.msra.mxu0 0.0
    %254 = vmatprep.subr.mxu0 0.0
    %255 = vmatpush1.msra.mxu0 0.0
    %256 = vmatprep.subr.mxu0 0.0
    %257 = vmatpush1.msra.mxu0 0.0
    %258 = vmatprep.subr.mxu0 0.0
    %259 = vmatpush1.msra.mxu0 0.0
    %260 = vmatprep.subr.mxu0 0.0
    %261 = vmatpush1.msra.mxu0 %v33
    %262 = vmatprep.subr.mxu0 0.0
    %263 = vmatpush2.msra.mxu0 0.0
    %264 = vmatprep.subr.mxu0 0.0
    %265 = vmatpush2.msra.mxu0 0.0
    %266 = vmatprep.subr.mxu0 0.0
    %267 = vmatpush2.msra.mxu0 0.0
    %268 = vmatprep.subr.mxu0 0.0
    %269 = vmatpush2.msra.mxu0 0.0
    %270 = vmatprep.subr.mxu0 0.0
    %271 = vmatpush2.msra.mxu0 0.0
    %272 = vmatprep.subr.mxu0 0.0
    %273 = vmatpush2.msra.mxu0 0.0
    %274 = vmatprep.subr.mxu0 0.0
    %275 = vmatpush2.msra.mxu0 0.0
    %276 = vmatprep.subr.mxu0 0.0
    %277 = vmatpush2.msra.mxu0 0.0
    %278 = vmatprep.subr.mxu0 0.0
    %279 = vmatpush2.msra.mxu0 0.0
    %280 = vmatprep.subr.mxu0 0.0
    %281 = vmatpush2.msra.mxu0 0.0
    %282 = vmatprep.subr.mxu0 0.0
    %283 = vmatpush2.msra.mxu0 0.0
    %284 = vmatprep.subr.mxu0 0.0
    %285 = vmatpush2.msra.mxu0 0.0
    %286 = vmatprep.subr.mxu0 0.0
    %287 = vmatpush2.msra.mxu0 0.0
    %288 = vmatprep.subr.mxu0 0.0
    %289 = vmatpush2.msra.mxu0 0.0
    %290 = vmatprep.subr.mxu0 0.0
    %291 = vmatpush2.msra.mxu0 0.0
    %292 = vmatprep.subr.mxu0 0.0
    %293 = vmatpush2.msra.mxu0 0.0
    %294 = vmatprep.mubr.f32.mxu0 0.0
    %295 = vmatmul.mubr.f32.gmra.mxu0 %v228
    %v296 = vpop.f32.mrf.mxu0
    %v297 = vadd.f32 0.0, %v296
    %v298 = vpop.f32.mrf.mxu0
    %299 = vdwg.mxu0
    %v301 = vsel %vm226, %v225, 0
    %303 = vmatprep.subr.mxu0 0.0
    %304 = vmatpush1.msra.mxu0 0.0
    %305 = vmatprep.subr.mxu0 0.0
    %306 = vmatpush1.msra.mxu0 0.0
    %307 = vmatprep.subr.mxu0 0.0
    %308 = vmatpush1.msra.mxu0 0.0
    %309 = vmatprep.subr.mxu0 0.0
    %310 = vmatpush1.msra.mxu0 0.0
    %311 = vmatprep.subr.mxu0 0.0
    %312 = vmatpush1.msra.mxu0 0.0
    %313 = vmatprep.subr.mxu0 0.0
    %314 = vmatpush1.msra.mxu0 0.0
    %315 = vmatprep.subr.mxu0 0.0
    %316 = vmatpush1.msra.mxu0 0.0
    %317 = vmatprep.subr.mxu0 0.0
    %318 = vmatpush1.msra.mxu0 0.0
    %319 = vmatprep.subr.mxu0 0.0
    %320 = vmatpush1.msra.mxu0 0.0
    %321 = vmatprep.subr.mxu0 0.0
    %322 = vmatpush1.msra.mxu0 0.0
    %323 = vmatprep.subr.mxu0 0.0
    %324 = vmatpush1.msra.mxu0 0.0
    %325 = vmatprep.subr.mxu0 0.0
    %326 = vmatpush1.msra.mxu0 0.0
    %327 = vmatprep.subr.mxu0 0.0
    %328 = vmatpush1.msra.mxu0 0.0
    %329 = vmatprep.subr.mxu0 0.0
    %330 = vmatpush1.msra.mxu0 0.0
    %331 = vmatprep.subr.mxu0 0.0
    %332 = vmatpush1.msra.mxu0 0.0
    %333 = vmatprep.subr.mxu0 0.0
    %334 = vmatpush1.msra.mxu0 %v34
    %335 = vmatprep.subr.mxu0 0.0
    %336 = vmatpush2.msra.mxu0 0.0
    %337 = vmatprep.subr.mxu0 0.0
    %338 = vmatpush2.msra.mxu0 0.0
    %339 = vmatprep.subr.mxu0 0.0
    %340 = vmatpush2.msra.mxu0 0.0
    %341 = vmatprep.subr.mxu0 0.0
    %342 = vmatpush2.msra.mxu0 0.0
    %343 = vmatprep.subr.mxu0 0.0
    %344 = vmatpush2.msra.mxu0 0.0
    %345 = vmatprep.subr.mxu0 0.0
    %346 = vmatpush2.msra.mxu0 0.0
    %347 = vmatprep.subr.mxu0 0.0
    %348 = vmatpush2.msra.mxu0 0.0
    %349 = vmatprep.subr.mxu0 0.0
    %350 = vmatpush2.msra.mxu0 0.0
    %351 = vmatprep.subr.mxu0 0.0
    %352 = vmatpush2.msra.mxu0 0.0
    %353 = vmatprep.subr.mxu0 0.0
    %354 = vmatpush2.msra.mxu0 0.0
    %355 = vmatprep.subr.mxu0 0.0
    %356 = vmatpush2.msra.mxu0 0.0
    %357 = vmatprep.subr.mxu0 0.0
    %358 = vmatpush2.msra.mxu0 0.0
    %359 = vmatprep.subr.mxu0 0.0
    %360 = vmatpush2.msra.mxu0 0.0
    %361 = vmatprep.subr.mxu0 0.0
    %362 = vmatpush2.msra.mxu0 0.0
    %363 = vmatprep.subr.mxu0 0.0
    %364 = vmatpush2.msra.mxu0 0.0
    %365 = vmatprep.subr.mxu0 0.0
    %366 = vmatpush2.msra.mxu0 0.0
    %367 = vmatprep.mubr.f32.mxu0 0.0
    %368 = vmatmul.mubr.f32.gmra.mxu0 %v301
    %v369 = vpop.f32.mrf.mxu0
    %v370 = vadd.f32 0.0, %v369
    %v371 = vpop.f32.mrf.mxu0
    %372 = vdwg.mxu0
    %v375 = vrot.slane %v370, 7
    %v376 = vsel %vm193, %v375, %v297
    %vm378 = vcmask 254976
    %379 = vst.msk [vmem:[#allocation6] sm:$0x3] %vm378, %v376
    %v380 = vrot.slane %v225, 7
    %v381 = vsel %vm193, %v380, %v224
    %383 = vst.msk [vmem:[#allocation7] sm:$0x3] %vm196, %v381
    // Predicated region
    $region18: #{tpu_custom_call.1} parent=1 // pred_check
      _
    $region19: #{tpu_custom_call.1} parent=1 // pred_check_branch
      %385 = sbr.rel (0) target = $region21
    $region20: #{tpu_custom_call.1} parent=1 // pred_region
      %s387 = ssub.s32 32, 32
      %388 = vsyncadd [#allocation5], %s387
      %s390 = sshll.u32 [#allocation6], 4
      %s391 = int_to_ptr.vmem [resolvable:$true] %s390
      %393 = dma.vmem_to_hbm [thread:$0]  %s391, 32, %s3, [#allocation5]
    $region21: #{tpu_custom_call.1} parent=1 // pred_fallthru
      _
    // Predicated region
    $region22: #{tpu_custom_call.1} parent=1 // pred_check
      _
    $region23: #{tpu_custom_call.1} parent=1 // pred_check_branch
      %395 = sbr.rel (0) target = $region25
    $region24: #{tpu_custom_call.1} parent=1 // pred_region
      %s397 = ssub.s32 32, 32
      %398 = vsyncadd [#allocation8], %s397
      %s400 = sshll.u32 [#allocation7], 4
      %s401 = int_to_ptr.vmem [resolvable:$true] %s400
      %403 = dma.vmem_to_hbm [thread:$0]  %s401, 32, %s4, [#allocation8]
    $region25: #{tpu_custom_call.1} parent=1 // pred_fallthru
      _
    // Predicated region
    $region26: #{tpu_custom_call.1} parent=1 // pred_check
      _
    $region27: #{tpu_custom_call.1} parent=1 // pred_check_branch
      %405 = sbr.rel (0) target = $region29
    $region28: #{tpu_custom_call.1} parent=1 // pred_region
      %406 = dma.done [#allocation5], 32
    $region29: #{tpu_custom_call.1} parent=1 // pred_fallthru
      _
    // Predicated region
    $region30: #{tpu_custom_call.1} parent=1 // pred_check
      _
    $region31: #{tpu_custom_call.1} parent=1 // pred_check_branch
      %408 = sbr.rel (0) target = $region33
    $region32: #{tpu_custom_call.1} parent=1 // pred_region
      %409 = dma.done [#allocation8], 32
    $region33: #{tpu_custom_call.1} parent=1 // pred_fallthru
      _
    %410 = vsyncpa [#allocation4], 1
    %411 = vsyncpa [#allocation5], 1
    %412 = vsyncpa [#allocation8], 1

</llo_original>
